<compile_context>
chip_gen: v7x
topology: tpu7x:2x2x1
jax: 0.10.0
libtpu: 0.0.40
codegen_flags: <defaults>
</compile_context>

<pallas_src>
import jax
import jax.numpy as jnp
from jax.experimental import pallas as pl
from jax.experimental.pallas import tpu as pltpu

HIDDEN = 128


def _round_up(x, m):
    return ((x + m - 1) // m) * m


def manager_kernel(x_ref, w1_ref, b1_ref, w2_ref, b2_ref, out_ref):
    # In-kernel cast of x: f32 comes straight from HBM, cast on the VPU.
    x = x_ref[...].astype(jnp.bfloat16)
    # Hidden layer: bf16 operands on the MXU, f32 accumulation.
    h = jnp.dot(x, w1_ref[...], preferred_element_type=jnp.float32)
    h = jnp.maximum(h + b1_ref[...], 0.0)          # bias + ReLU in f32 (VPU)
    # Output layer: cast activations to bf16 for the MXU, accumulate in f32.
    o = jnp.dot(h.astype(jnp.bfloat16), w2_ref[...],
                preferred_element_type=jnp.float32)
    out_ref[...] = (o + b2_ref[...]).astype(out_ref.dtype)


def prepare_params(w1, b1, w2, b2):
    """One-time parameter prep: bf16 matmul weights, f32 (1, F) biases.

    Call once and reuse the result; the per-call forward then has no
    wrapper-side XLA ops.
    """
    w1b = jnp.asarray(w1, jnp.bfloat16)
    w2b = jnp.asarray(w2, jnp.bfloat16)
    b1f = jnp.asarray(b1, jnp.float32).reshape(1, HIDDEN)
    b2f = jnp.asarray(b2, jnp.float32).reshape(1, -1)
    return w1b, b1f, w2b, b2f


def manager_forward(x, params):
    """Small-batch path: gridless pallas_call, everything VMEM-resident.

    x: (B, input_dim) f32 -> (B, num_goals) f32.
    """
    w1b, b1f, w2b, b2f = params
    B = x.shape[0]
    G = w2b.shape[1]
    return pl.pallas_call(
        manager_kernel,
        out_shape=jax.ShapeDtypeStruct((B, G), jnp.float32),
        in_specs=[pl.BlockSpec(memory_space=pltpu.MemorySpace.VMEM)] * 5,
        out_specs=pl.BlockSpec(memory_space=pltpu.MemorySpace.VMEM),
    )(x, w1b, b1f, w2b, b2f)


def _pick_tb(B, max_tb=4096):
    """Large tiles to amortize per-step overhead, but keep >=2 grid steps when
    B allows so the 'parallel' batch axis can shard across v7x's 2 TCs."""
    if B <= 256:
        return 128
    tb = _round_up(pl.cdiv(B, 4), 128)       # aim for ~4 grid steps
    return max(128, min(max_tb, tb))


def manager_forward_batched(x, params, *, tb=None):
    """Large-batch path: tile the batch axis (parallel -> both TCs on v7x),
    keep weights grid-invariant (DMA'd once, VMEM-resident across the loop).

    x: (B, input_dim) f32 -> (B, num_goals) f32. Ragged last block is handled
    by Pallas (masked writeback) -- no padding / slicing passes.
    """
    w1b, b1f, w2b, b2f = params
    B, D = x.shape
    G = w2b.shape[1]
    if tb is None:
        tb = _pick_tb(B)

    return pl.pallas_call(
        manager_kernel,
        out_shape=jax.ShapeDtypeStruct((B, G), jnp.float32),
        grid_spec=pltpu.PrefetchScalarGridSpec(
            num_scalar_prefetch=0,
            grid=(pl.cdiv(B, tb),),
            in_specs=[
                pl.BlockSpec((tb, D), lambda i: (i, 0)),        # streams x (f32)
                pl.BlockSpec((D, HIDDEN), lambda i: (0, 0)),    # grid-invariant
                pl.BlockSpec((1, HIDDEN), lambda i: (0, 0)),    # grid-invariant
                pl.BlockSpec((HIDDEN, G), lambda i: (0, 0)),    # grid-invariant
                pl.BlockSpec((1, G), lambda i: (0, 0)),         # grid-invariant
            ],
            # Last block dim == full array dim (G) -> legal; masked vst cost is
            # negligible and we avoid the 16x-padded writeback + slice pass.
            out_specs=pl.BlockSpec((tb, G), lambda i: (i, 0)),
        ),
        compiler_params=pltpu.CompilerParams(
            dimension_semantics=("parallel",),
            vmem_limit_bytes=32 * 1024 * 1024,  # tiles are tiny on all generations
        ),
    )(x, w1b, b1f, w2b, b2f)


def init_params(key, input_dim, num_goals):
    # Deterministic synthetic init (mimics PyTorch Linear's uniform fan-in init).
    k1, k2, k3, k4 = jax.random.split(key, 4)
    bound1 = 1.0 / jnp.sqrt(input_dim)
    bound2 = 1.0 / jnp.sqrt(HIDDEN)
    w1 = jax.random.uniform(k1, (input_dim, HIDDEN), jnp.float32, -bound1, bound1)
    b1 = jax.random.uniform(k2, (1, HIDDEN), jnp.float32, -bound1, bound1)
    w2 = jax.random.uniform(k3, (HIDDEN, num_goals), jnp.float32, -bound2, bound2)
    b2 = jax.random.uniform(k4, (1, num_goals), jnp.float32, -bound2, bound2)
    return w1, b1, w2, b2


def _ref_bf16(x, w1, b1, w2, b2):
    """Reference with the same bf16 rounding / f32 accumulation as the kernel."""
    xb = x.astype(jnp.bfloat16).astype(jnp.float32)
    w1b = w1.astype(jnp.bfloat16).astype(jnp.float32)
    w2b = w2.astype(jnp.bfloat16).astype(jnp.float32)
    h = jnp.maximum(xb @ w1b + b1, 0.0)
    return h.astype(jnp.bfloat16).astype(jnp.float32) @ w2b + b2


if __name__ == "__main__":
    input_dim = 32
    num_goals = 8
    batch = 8

    key = jax.random.PRNGKey(0)
    kx, kp = jax.random.split(key)
    x = jax.random.normal(kx, (batch, input_dim), jnp.float32)
    w1, b1, w2, b2 = init_params(kp, input_dim, num_goals)

    # One-time parameter prep (hoisted out of the per-call path).
    params = prepare_params(w1, b1, w2, b2)

    # --- gridless small-batch path ---
    fwd = jax.jit(manager_forward)
    out = jax.block_until_ready(fwd(x, params))
    assert out.shape == (batch, num_goals)

    ref = _ref_bf16(x, w1, b1, w2, b2)
    assert jnp.allclose(out, ref, atol=1e-3, rtol=1e-3), "mismatch vs bf16 reference"

    ref_f32 = jnp.maximum(x @ w1 + b1, 0.0) @ w2 + b2
    assert jnp.allclose(out, ref_f32, atol=1e-1, rtol=1e-1), "drifted from f32 semantics"

    # --- batch-tiled path (parallel grid over batch, ragged last block) ---
    batch_big = 300   # deliberately NOT a multiple of tb -> exercises cdiv grid
    x_big = jax.random.normal(jax.random.PRNGKey(1), (batch_big, input_dim),
                              jnp.float32)
    fwd_big = jax.jit(manager_forward_batched)
    out_big = jax.block_until_ready(fwd_big(x_big, params))
    assert out_big.shape == (batch_big, num_goals)
    ref_big = _ref_bf16(x_big, w1, b1, w2, b2)
    assert jnp.allclose(out_big, ref_big, atol=1e-3, rtol=1e-3), "batched mismatch"

    print("KERNEL_OK")
</pallas_src>

<mosaic_0001>
module attributes {stable_mosaic.version = 11 : i64} {
  func.func @manager_kernel(%arg0: memref<8x32xf32, #tpu.memory_space<vmem>>, %arg1: memref<32x128xbf16, #tpu.memory_space<vmem>>, %arg2: memref<1x128xf32, #tpu.memory_space<vmem>>, %arg3: memref<128x8xbf16, #tpu.memory_space<vmem>>, %arg4: memref<1x8xf32, #tpu.memory_space<vmem>>, %arg5: memref<8x8xf32, #tpu.memory_space<vmem>>) attributes {dimension_semantics = [], scalar_prefetch = 0 : i64, scratch_operands = 0 : i64, tpu.core_type = #tpu.core_type<tc>} {
    %c0 = arith.constant 0 : index
    %c0_0 = arith.constant 0 : index
    %0 = vector.load %arg0[%c0, %c0_0] : memref<8x32xf32, #tpu.memory_space<vmem>>, vector<8x32xf32>
    %1 = arith.truncf %0 : vector<8x32xf32> to vector<8x32xbf16>
    %c0_1 = arith.constant 0 : index
    %c0_2 = arith.constant 0 : index
    %2 = vector.load %arg1[%c0_1, %c0_2] : memref<32x128xbf16, #tpu.memory_space<vmem>>, vector<32x128xbf16>
    %cst = arith.constant dense<0.000000e+00> : vector<8x128xf32>
    %3 = tpu.matmul %1, %2, %cst {dimension_numbers = #tpu.dot_dimension_numbers<[1], [0], [0], [1], [0, 0, 1, 1], [], []>} : vector<8x32xbf16>, vector<32x128xbf16>, vector<8x128xf32> -> vector<8x128xf32>
    %c0_3 = arith.constant 0 : index
    %c0_4 = arith.constant 0 : index
    %4 = vector.load %arg2[%c0_3, %c0_4] : memref<1x128xf32, #tpu.memory_space<vmem>>, vector<1x128xf32>
    %5 = vector.broadcast %4 : vector<1x128xf32> to vector<8x128xf32>
    %6 = arith.addf %3, %5 : vector<8x128xf32>
    %cst_5 = arith.constant 0.000000e+00 : f32
    %7 = vector.broadcast %cst_5 : f32 to vector<8x128xf32>
    %8 = arith.maximumf %6, %7 : vector<8x128xf32>
    %9 = arith.truncf %8 : vector<8x128xf32> to vector<8x128xbf16>
    %c0_6 = arith.constant 0 : index
    %c0_7 = arith.constant 0 : index
    %10 = vector.load %arg3[%c0_6, %c0_7] : memref<128x8xbf16, #tpu.memory_space<vmem>>, vector<128x8xbf16>
    %cst_8 = arith.constant dense<0.000000e+00> : vector<8x8xf32>
    %11 = tpu.matmul %9, %10, %cst_8 {dimension_numbers = #tpu.dot_dimension_numbers<[1], [0], [0], [1], [0, 0, 1, 1], [], []>} : vector<8x128xbf16>, vector<128x8xbf16>, vector<8x8xf32> -> vector<8x8xf32>
    %c0_9 = arith.constant 0 : index
    %c0_10 = arith.constant 0 : index
    %12 = vector.load %arg4[%c0_9, %c0_10] : memref<1x8xf32, #tpu.memory_space<vmem>>, vector<1x8xf32>
    %13 = vector.broadcast %12 : vector<1x8xf32> to vector<8x8xf32>
    %14 = arith.addf %11, %13 : vector<8x8xf32>
    %c0_11 = arith.constant 0 : index
    %c0_12 = arith.constant 0 : index
    %15 = vector.load %arg5[%c0_11, %c0_12] : memref<8x8xf32, #tpu.memory_space<vmem>>, vector<8x8xf32>
    tpu.vector_store %arg5[%c0_11, %c0_12], %14 {strides = array<i32>} : memref<8x8xf32, #tpu.memory_space<vmem>>, vector<8x8xf32>,
    return
  }
}

</mosaic_0001>

<llo_original>
// kernel: manager_forward.1
$region0: #{manager_forward.1}
  #allocation0 [shape = 'u32[]', space=smem, size = 0x4, offset = 0x4, fixed_abs, tag = 'smem constant byte address 0x4 - core index']
  #allocation1 [shape = 'u32[144,128]{1,0:T(1,128)}', space=vmem, size = 0x12000, scoped, tag = 'internal scratch']
  %s0 = inlined_call_operand.vmem [shape: f32[8,32], index: 0, kind: input, shape index: {}]
  %s1 = inlined_call_operand.vmem [shape: bf16[32,128], index: 1, kind: input, shape index: {}]
  %s2 = inlined_call_operand.vmem [shape: f32[1,128], index: 2, kind: input, shape index: {}]
  %s3 = inlined_call_operand.vmem [shape: bf16[128,8], index: 3, kind: input, shape index: {}]
  %s4 = inlined_call_operand.vmem [shape: f32[1,8], index: 4, kind: input, shape index: {}]
  %s5 = inlined_call_operand.hbm [shape: f32[8,8], index: 5, kind: output, shape index: {}]
  %s6 = sld [smem:[#allocation0]]
  $region30: #{manager_forward.1} parent=0
    _
  %s8 = ssub.s32 1, %s6
  %s9 = scalar_select 0, %s8, %s6
  $region1: #{manager_forward.1} parent=0
    #allocation2 [shape = 'u8[4096]{0}', space=vmem, size = 0x1000, scoped, tag = 'output window, operand 0, single buffered']
    #allocation3 [shape = 's32[1]{0}', space=sflag, size = 0x4, scoped, tag = 'scoped memory for manager_forward.1']
    %10 = vsyncpa [#allocation3], 0
    // Predicated region
    $region2: #{manager_forward.1} parent=1 // pred_check
      _
    $region3: #{manager_forward.1} parent=1 // pred_check_branch
      %12 = sbr.rel (0) target = $region5
    $region4: #{manager_forward.1} parent=1 // pred_region
      _
    $region5: #{manager_forward.1} parent=1 // pred_fallthru
      _
    // Predicated region
    $region6: #{manager_forward.1} parent=1 // pred_check
      _
    $region7: #{manager_forward.1} parent=1 // pred_check_branch
      %14 = sbr.rel (0) target = $region9
    $region8: #{manager_forward.1} parent=1 // pred_region
      _
    $region9: #{manager_forward.1} parent=1 // pred_fallthru
      _
    // Predicated region
    $region10: #{manager_forward.1} parent=1 // pred_check
      _
    $region11: #{manager_forward.1} parent=1 // pred_check_branch
      %16 = sbr.rel (0) target = $region13
    $region12: #{manager_forward.1} parent=1 // pred_region
      _
    $region13: #{manager_forward.1} parent=1 // pred_fallthru
      _
    // Predicated region
    $region14: #{manager_forward.1} parent=1 // pred_check
      _
    $region15: #{manager_forward.1} parent=1 // pred_check_branch
      %18 = sbr.rel (0) target = $region17
    $region16: #{manager_forward.1} parent=1 // pred_region
      _
    $region17: #{manager_forward.1} parent=1 // pred_fallthru
      _
    // Predicated region
    $region18: #{manager_forward.1} parent=1 // pred_check
      _
    $region19: #{manager_forward.1} parent=1 // pred_check_branch
      %20 = sbr.rel (0) target = $region21
    $region20: #{manager_forward.1} parent=1 // pred_region
      _
    $region21: #{manager_forward.1} parent=1 // pred_fallthru
      _
    %v22 = vld [vmem:[%s0] sm:$0xff]
    %v23 = vpack.c.bf16 %v22, %v22
    %v24 = vld [vmem:[%s1] sm:$0xf]
    %v25 = vld [vmem:[%s1 + $0x4] sm:$0xf]
    %v26 = vld [vmem:[%s1 + $0x8] sm:$0xf]
    %v27 = vld [vmem:[%s1 + $0xc] sm:$0xf]
    %v28 = vld [vmem:[%s2] sm:$0x1]
    %v30 = vlaneseq
    %v31 = vshrl.u32 %v30, 7
    %v32 = vsub.s32 0, %v31
    %v33 = vrot.slane %v28, %v32
    %v39 = vunpack.c.l.b16 %v24
    %v40 = vunpack.c.l.b16 %v25
    %v41 = vunpack.c.l.b16 %v26
    %v42 = vunpack.c.l.b16 %v27
    %v43 = vpack.c.b16 %v40, %v39
    %v44 = vpack.c.b16 %v42, %v41
    %vm47 = vcmask 261120
    %v49 = vsel %vm47, %v23, 0
    %51 = vmatprep.subr.bf16.mxu0 0
    %52 = vmatpush1.bf16.msra.mxu0 %v43
    %53 = vmatprep.subr.bf16.mxu0 0
    %54 = vmatpush1.bf16.msra.mxu0 %v44
    %55 = vmatprep.subr.bf16.mxu0 0
    %56 = vmatpush1.bf16.msra.mxu0 0
    %57 = vmatprep.subr.bf16.mxu0 0
    %58 = vmatpush1.bf16.msra.mxu0 0
    %59 = vmatprep.subr.bf16.mxu0 0
    %60 = vmatpush1.bf16.msra.mxu0 0
    %61 = vmatprep.subr.bf16.mxu0 0
    %62 = vmatpush1.bf16.msra.mxu0 0
    %63 = vmatprep.subr.bf16.mxu0 0
    %64 = vmatpush1.bf16.msra.mxu0 0
    %65 = vmatprep.subr.bf16.mxu0 0
    %66 = vmatpush1.bf16.msra.mxu0 0
    %67 = vmatprep.subr.bf16.mxu0 0
    %68 = vmatpush1.bf16.msra.mxu0 0
    %69 = vmatprep.subr.bf16.mxu0 0
    %70 = vmatpush1.bf16.msra.mxu0 0
    %71 = vmatprep.subr.bf16.mxu0 0
    %72 = vmatpush1.bf16.msra.mxu0 0
    %73 = vmatprep.subr.bf16.mxu0 0
    %74 = vmatpush1.bf16.msra.mxu0 0
    %75 = vmatprep.subr.bf16.mxu0 0
    %76 = vmatpush1.bf16.msra.mxu0 0
    %77 = vmatprep.subr.bf16.mxu0 0
    %78 = vmatpush1.bf16.msra.mxu0 0
    %79 = vmatprep.subr.bf16.mxu0 0
    %80 = vmatpush1.bf16.msra.mxu0 0
    %81 = vmatprep.subr.bf16.mxu0 0
    %82 = vmatpush1.bf16.msra.mxu0 0
    %83 = vmatprep.mubr.bf16.mxu0 0
    %84 = vmatmul.mubr.bf16.gmra.mrb[0].mxu0 %v49
    %v85 = vpop.f32.mrb[0].mxu0
    %v86 = vadd.f32 %v33, %v85
    %v87 = vpop.f32.mrb[0].mxu0
    %v88 = vpop.f32.mrb[0].mxu0
    %v89 = vpop.f32.mrb[0].mxu0
    %90 = vdwg.mxu0
    %v91 = vmax.f32 %v86, 0.0
    %v92 = vpack.c.bf16 %v91, %v91
    %v93 = vld [vmem:[%s3] sm:$0xf]
    %v94 = vld [vmem:[%s3 + $0x4] sm:$0xf]
    %v95 = vld [vmem:[%s3 + $0x8] sm:$0xf]
    %v96 = vld [vmem:[%s3 + $0xc] sm:$0xf]
    %v97 = vld [vmem:[%s3 + $0x10] sm:$0xf]
    %v98 = vld [vmem:[%s3 + $0x14] sm:$0xf]
    %v99 = vld [vmem:[%s3 + $0x18] sm:$0xf]
    %v100 = vld [vmem:[%s3 + $0x1c] sm:$0xf]
    %v101 = vld [vmem:[%s3 + $0x20] sm:$0xf]
    %v102 = vld [vmem:[%s3 + $0x24] sm:$0xf]
    %v103 = vld [vmem:[%s3 + $0x28] sm:$0xf]
    %v104 = vld [vmem:[%s3 + $0x2c] sm:$0xf]
    %v105 = vld [vmem:[%s3 + $0x30] sm:$0xf]
    %v106 = vld [vmem:[%s3 + $0x34] sm:$0xf]
    %v107 = vld [vmem:[%s3 + $0x38] sm:$0xf]
    %v108 = vld [vmem:[%s3 + $0x3c] sm:$0xf]
    %v109 = vld [vmem:[%s4] sm:$0x1]
    %v111 = vlaneseq
    %v112 = vshrl.u32 %v111, 7
    %v113 = vsub.s32 0, %v112
    %v114 = vrot.slane %v109, %v113
    %v132 = vunpack.c.l.b16 %v93
    %v133 = vunpack.c.l.b16 %v94
    %v134 = vunpack.c.l.b16 %v95
    %v135 = vunpack.c.l.b16 %v96
    %v136 = vunpack.c.l.b16 %v97
    %v137 = vunpack.c.l.b16 %v98
    %v138 = vunpack.c.l.b16 %v99
    %v139 = vunpack.c.l.b16 %v100
    %v140 = vunpack.c.l.b16 %v101
    %v141 = vunpack.c.l.b16 %v102
    %v142 = vunpack.c.l.b16 %v103
    %v143 = vunpack.c.l.b16 %v104
    %v144 = vunpack.c.l.b16 %v105
    %v145 = vunpack.c.l.b16 %v106
    %v146 = vunpack.c.l.b16 %v107
    %v147 = vunpack.c.l.b16 %v108
    %v148 = vpack.c.b16 %v133, %v132
    %v149 = vpack.c.b16 %v135, %v134
    %v150 = vpack.c.b16 %v137, %v136
    %v151 = vpack.c.b16 %v139, %v138
    %v152 = vpack.c.b16 %v141, %v140
    %v153 = vpack.c.b16 %v143, %v142
    %v154 = vpack.c.b16 %v145, %v144
    %v155 = vpack.c.b16 %v147, %v146
    %164 = vmatprep.subr.bf16.mxu0 0
    %165 = vmatpush1.bf16.msra.mxu0 %v148
    %166 = vmatprep.subr.bf16.mxu0 0
    %167 = vmatpush1.bf16.msra.mxu0 %v149
    %168 = vmatprep.subr.bf16.mxu0 0
    %169 = vmatpush1.bf16.msra.mxu0 %v150
    %170 = vmatprep.subr.bf16.mxu0 0
    %171 = vmatpush1.bf16.msra.mxu0 %v151
    %172 = vmatprep.subr.bf16.mxu0 0
    %173 = vmatpush1.bf16.msra.mxu0 %v152
    %174 = vmatprep.subr.bf16.mxu0 0
    %175 = vmatpush1.bf16.msra.mxu0 %v153
    %176 = vmatprep.subr.bf16.mxu0 0
    %177 = vmatpush1.bf16.msra.mxu0 %v154
    %178 = vmatprep.subr.bf16.mxu0 0
    %179 = vmatpush1.bf16.msra.mxu0 %v155
    %180 = vmatprep.subr.bf16.mxu0 0
    %181 = vmatpush1.bf16.msra.mxu0 0
    %182 = vmatprep.subr.bf16.mxu0 0
    %183 = vmatpush1.bf16.msra.mxu0 0
    %184 = vmatprep.subr.bf16.mxu0 0
    %185 = vmatpush1.bf16.msra.mxu0 0
    %186 = vmatprep.subr.bf16.mxu0 0
    %187 = vmatpush1.bf16.msra.mxu0 0
    %188 = vmatprep.subr.bf16.mxu0 0
    %189 = vmatpush1.bf16.msra.mxu0 0
    %190 = vmatprep.subr.bf16.mxu0 0
    %191 = vmatpush1.bf16.msra.mxu0 0
    %192 = vmatprep.subr.bf16.mxu0 0
    %193 = vmatpush1.bf16.msra.mxu0 0
    %194 = vmatprep.subr.bf16.mxu0 0
    %195 = vmatpush1.bf16.msra.mxu0 0
    %196 = vmatprep.mubr.bf16.mxu0 0
    %197 = vmatmul.mubr.bf16.gmra.mrb[0].mxu0 %v92
    %v198 = vpop.f32.mrb[0].mxu0
    %v199 = vadd.f32 %v114, %v198
    %v200 = vpop.f32.mrb[0].mxu0
    %v201 = vpop.f32.mrb[0].mxu0
    %v202 = vpop.f32.mrb[0].mxu0
    %203 = vdwg.mxu0
    %vm204 = vcmask 64512
    %205 = vst.msk [vmem:[#allocation2] sm:$0xff] %vm204, %v199
    // Predicated region
    $region22: #{manager_forward.1} parent=1 // pred_check
      _
    $region23: #{manager_forward.1} parent=1 // pred_check_branch
      %207 = sbr.rel (0) target = $region25
    $region24: #{manager_forward.1} parent=1 // pred_region
      %s209 = ssub.s32 128, 128
      %210 = vsyncadd [#allocation3], %s209
      %s212 = sshll.u32 [#allocation2], 4
      %s213 = int_to_ptr.vmem [resolvable:$true] %s212
      %215 = dma.vmem_to_hbm [thread:$0]  %s213, 128, %s5, [#allocation3]
    $region25: #{manager_forward.1} parent=1 // pred_fallthru
      _
    // Predicated region
    $region26: #{manager_forward.1} parent=1 // pred_check
      _
    $region27: #{manager_forward.1} parent=1 // pred_check_branch
      %217 = sbr.rel (0) target = $region29
    $region28: #{manager_forward.1} parent=1 // pred_region
      %218 = dma.done [#allocation3], 128
    $region29: #{manager_forward.1} parent=1 // pred_fallthru
      _
    %219 = vsyncpa [#allocation3], 1

</llo_original>
